<compile_context>
chip_gen: v7x
topology: tpu7x:2x2x1
jax: 0.10.0
libtpu: 0.0.40
codegen_flags: <defaults>
</compile_context>

<pallas_src>
import jax
import jax.numpy as jnp
from jax.experimental import pallas as pl
from jax.experimental.pallas import tpu as pltpu


# ----------------------------- Pallas kernel --------------------------------
def _fused_convt_matmul_kernel(x_ref, w_ref, b_ref, o_ref):
    """One row-tile of the banded direct-conv matmul.

    x_ref: (TM, CK)  bf16  rows = (batch, out-row); cols = (kh, w_in, 2*C_in)
    w_ref: (CK, N)   bf16  banded complex-as-real weight; N = (w_out, 2*C_out)
    b_ref: (1, N)    f32   combined bias tiled over w_out
    o_ref: (TM, N)   f32   output tile, written exactly once
    """
    acc = jnp.dot(x_ref[...], w_ref[...], preferred_element_type=jnp.float32)
    o_ref[...] = (acc + b_ref[...]).astype(o_ref.dtype)


# ------------------------------ helpers --------------------------------------
def _vmem_limit_bytes():
    # Generation-dependent VMEM limit (v7x has 64 MiB physical, v5e/v6e 128 MiB).
    try:
        cap = pltpu.get_tpu_info().vmem_capacity_bytes
    except Exception:
        cap = 64 * 1024 * 1024
    return int(min(cap * 3 // 4, 100 * 1024 * 1024))


def _pick_row_tile(m_total, ck, n_cols):
    """Row tile (multiple of 8) giving a few parallel grid steps while keeping
    double-buffered blocks comfortably inside a ~40 MiB VMEM budget."""
    def blk_bytes(tm):
        return (tm * ck * 2 * 2            # x tile, bf16, double buffered
                + tm * n_cols * 4 * 2      # out tile, f32, double buffered
                + ck * n_cols * 2 * 2      # resident weight, bf16
                + n_cols * 4 * 2)          # bias
    if m_total >= 32:
        tm = max(8, (m_total // 4) // 8 * 8)   # aim for >=4 grid steps
    else:
        tm = m_total                            # single full-extent block
    tm = min(tm, 512)
    while tm > 8 and blk_bytes(tm) > 40 * 1024 * 1024:
        tm //= 2
    return tm


# ------------------------------ wrapper ---------------------------------------
def complex_conv_transpose(x, w_re, w_im, b_re, b_im):
    """x: (B, 2, C_in, H, W); w_*: (C_in, C_out, K, K); b_*: (C_out,)."""
    B, two, C_in, H, W = x.shape
    assert two == 2
    C_out, K = w_re.shape[1], w_re.shape[2]
    H_out, W_out = H + K - 1, W + K - 1
    W_pad = W + 2 * (K - 1)
    C_in2, C2 = 2 * C_in, 2 * C_out
    ck = K * W_pad * C_in2           # contraction dim (480 at the test shape)
    n_cols = W_out * C2              # lane-dense output dim (144 at the test shape)

    # ---- input: pack [real | imag] channels last, zero-pad, im2col over kh.
    xc = jnp.transpose(jnp.concatenate([x[:, 0], x[:, 1]], axis=1), (0, 2, 3, 1))
    x_padded = jnp.pad(xc, ((0, 0), (K - 1, K - 1), (K - 1, K - 1), (0, 0)))
    x_col = jnp.stack([x_padded[:, kh:kh + H_out] for kh in range(K)], axis=2)
    x_col = x_col.reshape(B * H_out, ck).astype(jnp.bfloat16)

    # ---- weights: complex-as-real block per tap, kernel flipped (convT == conv
    #      on the padded input), kw folded into a banded (w_in -> w_out) matrix.
    #      [xr | xi] @ [[Wr, Wi], [-Wi, Wr]] = [xr@Wr - xi@Wi | xr@Wi + xi@Wr]
    wr = jnp.transpose(w_re, (2, 3, 0, 1))             # (K, K, C_in, C_out)
    wi = jnp.transpose(w_im, (2, 3, 0, 1))
    top = jnp.concatenate([wr, wi], axis=-1)           # rows fed by x_real
    bot = jnp.concatenate([-wi, wr], axis=-1)          # rows fed by x_imag
    wc = jnp.concatenate([top, bot], axis=2)           # (K, K, 2*C_in, 2*C_out)
    wflip = wc[::-1, ::-1]                             # flip both spatial dims
    kw_idx = jnp.arange(W_pad)[:, None] - jnp.arange(W_out)[None, :]   # (W_pad, W_out)
    valid = (kw_idx >= 0) & (kw_idx < K)
    band = wflip[:, jnp.clip(kw_idx, 0, K - 1)]        # (K, W_pad, W_out, 2C_in, 2C_out)
    band = jnp.where(valid[None, :, :, None, None], band, 0.0)
    w_mat = jnp.transpose(band, (0, 1, 3, 2, 4)).reshape(ck, n_cols).astype(jnp.bfloat16)

    # ---- combined bias (each ConvTranspose2d carries its own bias):
    #      real part gets (b_re - b_im), imag part gets (b_re + b_im).
    b_comb = jnp.concatenate([b_re - b_im, b_re + b_im])
    bias_row = jnp.tile(b_comb, W_out).reshape(1, n_cols).astype(jnp.float32)

    # ---- tiling: 1-D parallel grid over flattened (batch, out-row) tiles.
    m_total = B * H_out
    tm = _pick_row_tile(m_total, ck, n_cols)
    grid_m = pl.cdiv(m_total, tm)
    m_padded = grid_m * tm
    if m_padded != m_total:
        x_col = jnp.pad(x_col, ((0, m_padded - m_total), (0, 0)))

    out2d = pl.pallas_call(
        _fused_convt_matmul_kernel,
        out_shape=jax.ShapeDtypeStruct((m_padded, n_cols), x.dtype),
        grid=(grid_m,),
        in_specs=[
            pl.BlockSpec((tm, ck), lambda i: (i, 0)),
            pl.BlockSpec((ck, n_cols), lambda i: (0, 0)),
            pl.BlockSpec((1, n_cols), lambda i: (0, 0)),
        ],
        out_specs=pl.BlockSpec((tm, n_cols), lambda i: (i, 0)),
        compiler_params=pltpu.CompilerParams(
            dimension_semantics=("parallel",),
            vmem_limit_bytes=_vmem_limit_bytes(),
        ),
    )(x_col, w_mat, bias_row)

    # ---- back to the PyTorch convention: (B, 2, C_out, H_out, W_out).
    out = out2d[:m_total].reshape(B, H_out, W_out, C2)
    real = jnp.transpose(out[..., :C_out], (0, 3, 1, 2))
    imag = jnp.transpose(out[..., C_out:], (0, 3, 1, 2))
    return jnp.stack((real, imag), axis=1)


# ---------------- pure-JAX reference (independent lowering path) -------------
def _conv_transpose_ref(x, w, b):
    # x: (B, C_in, H, W), w: (C_in, C_out, K, K)  [PyTorch ConvTranspose2d layout]
    K = w.shape[2]
    wc = jnp.flip(jnp.transpose(w, (1, 0, 2, 3)), axis=(2, 3))  # (C_out, C_in, K, K)
    out = jax.lax.conv_general_dilated(
        x, wc, window_strides=(1, 1),
        padding=[(K - 1, K - 1), (K - 1, K - 1)],
        dimension_numbers=('NCHW', 'OIHW', 'NCHW'),
        precision=jax.lax.Precision.HIGHEST)
    return out + b[None, :, None, None]


def _module_ref(x, w_re, w_im, b_re, b_im):
    real = _conv_transpose_ref(x[:, 0], w_re, b_re) - _conv_transpose_ref(x[:, 1], w_im, b_im)
    imag = _conv_transpose_ref(x[:, 1], w_re, b_re) + _conv_transpose_ref(x[:, 0], w_im, b_im)
    return jnp.stack((real, imag), axis=1)


if __name__ == "__main__":
    B, C_in, C_out, H, W, K = 2, 4, 4, 16, 16, 3

    key = jax.random.PRNGKey(0)
    k_x, k_wr, k_wi, k_br, k_bi = jax.random.split(key, 5)

    x = jax.random.normal(k_x, (B, 2, C_in, H, W), dtype=jnp.float32)
    # ConvTranspose2d weight shape: (in_channel, out_channel, kH, kW); bias: (out_channel,)
    w_re = jax.random.normal(k_wr, (C_in, C_out, K, K), dtype=jnp.float32) * 0.1
    w_im = jax.random.normal(k_wi, (C_in, C_out, K, K), dtype=jnp.float32) * 0.1
    b_re = jax.random.normal(k_br, (C_out,), dtype=jnp.float32) * 0.1
    b_im = jax.random.normal(k_bi, (C_out,), dtype=jnp.float32) * 0.1

    out = complex_conv_transpose(x, w_re, w_im, b_re, b_im)
    out = jax.block_until_ready(out)

    ref = _module_ref(x, w_re, w_im, b_re, b_im)
    assert out.shape == (B, 2, C_out, H + K - 1, W + K - 1), out.shape
    # bf16 MXU inputs with f32 accumulation vs. the f32 HIGHEST-precision XLA
    # conv reference: tolerance sized for bf16 rounding over a 72-term contraction.
    max_err = float(jnp.max(jnp.abs(out - ref)))
    assert jnp.allclose(out, ref, atol=2e-2, rtol=2e-2), max_err

    print("KERNEL_OK")
</pallas_src>

<mosaic_0001>
module attributes {stable_mosaic.version = 11 : i64} {
  func.func @_fused_convt_matmul_kernel(%arg0: i32, %arg1: memref<8x480xbf16, #tpu.memory_space<vmem>>, %arg2: memref<480x144xbf16, #tpu.memory_space<vmem>>, %arg3: memref<1x144xf32, #tpu.memory_space<vmem>>, %arg4: memref<8x144xf32, #tpu.memory_space<vmem>>) attributes {dimension_semantics = [#tpu.dimension_semantics<parallel>], iteration_bounds = array<i64: 5>, scalar_prefetch = 0 : i64, scratch_operands = 0 : i64, tpu.core_type = #tpu.core_type<tc>, window_params = [{transform_indices = @transform_0, window_bounds = array<i64: 8, 480>}, {pipeline_mode = #tpu.pipeline_mode<synchronous>, transform_indices = @transform_1, window_bounds = array<i64: 480, 144>}, {pipeline_mode = #tpu.pipeline_mode<synchronous>, transform_indices = @transform_2, window_bounds = array<i64: 1, 144>}, {transform_indices = @transform_3, window_bounds = array<i64: 8, 144>}]} {
    %c0 = arith.constant 0 : index
    %c0_0 = arith.constant 0 : index
    %0 = vector.load %arg1[%c0, %c0_0] : memref<8x480xbf16, #tpu.memory_space<vmem>>, vector<8x480xbf16>
    %c0_1 = arith.constant 0 : index
    %c0_2 = arith.constant 0 : index
    %1 = vector.load %arg2[%c0_1, %c0_2] : memref<480x144xbf16, #tpu.memory_space<vmem>>, vector<480x144xbf16>
    %cst = arith.constant dense<0.000000e+00> : vector<8x144xf32>
    %2 = tpu.matmul %0, %1, %cst {dimension_numbers = #tpu.dot_dimension_numbers<[1], [0], [0], [1], [0, 0, 1, 1], [], []>} : vector<8x480xbf16>, vector<480x144xbf16>, vector<8x144xf32> -> vector<8x144xf32>
    %c0_3 = arith.constant 0 : index
    %c0_4 = arith.constant 0 : index
    %3 = vector.load %arg3[%c0_3, %c0_4] : memref<1x144xf32, #tpu.memory_space<vmem>>, vector<1x144xf32>
    %4 = vector.broadcast %3 : vector<1x144xf32> to vector<8x144xf32>
    %5 = arith.addf %2, %4 : vector<8x144xf32>
    %c0_5 = arith.constant 0 : index
    %c0_6 = arith.constant 0 : index
    %6 = vector.load %arg4[%c0_5, %c0_6] : memref<8x144xf32, #tpu.memory_space<vmem>>, vector<8x144xf32>
    tpu.vector_store %arg4[%c0_5, %c0_6], %5 {strides = array<i32>} : memref<8x144xf32, #tpu.memory_space<vmem>>, vector<8x144xf32>,
    return
  }
  func.func @transform_0(%arg0: i32) -> (i32, i32) {
    %c0_i32 = arith.constant 0 : i32
    %c0_i32_0 = arith.constant 0 : i32
    return %arg0, %c0_i32 : i32, i32
  }
  func.func @transform_1(%arg0: i32) -> (i32, i32) {
    %c0_i32 = arith.constant 0 : i32
    %c0_i32_0 = arith.constant 0 : i32
    %c0_i32_1 = arith.constant 0 : i32
    return %c0_i32, %c0_i32_0 : i32, i32
  }
  func.func @transform_2(%arg0: i32) -> (i32, i32) {
    %c0_i32 = arith.constant 0 : i32
    %c0_i32_0 = arith.constant 0 : i32
    %c0_i32_1 = arith.constant 0 : i32
    return %c0_i32, %c0_i32_0 : i32, i32
  }
  func.func @transform_3(%arg0: i32) -> (i32, i32) {
    %c0_i32 = arith.constant 0 : i32
    %c0_i32_0 = arith.constant 0 : i32
    return %arg0, %c0_i32 : i32, i32
  }
}

</mosaic_0001>

<llo_original>
// kernel: tpu_custom_call.1
$region0: #{tpu_custom_call.1}
  #allocation0 [shape = 'u32[]', space=smem, size = 0x4, offset = 0x4, fixed_abs, tag = 'smem constant byte address 0x4 - core index']
  #allocation1 [shape = 'u32[144,128]{1,0:T(1,128)}', space=vmem, size = 0x12000, scoped, tag = 'internal scratch']
  %s0 = inlined_call_operand.vmem [shape: bf16[40,480], index: 0, kind: input, shape index: {}]
  %s1 = inlined_call_operand.vmem [shape: bf16[480,144], index: 1, kind: input, shape index: {}]
  %s2 = inlined_call_operand.vmem [shape: f32[1,144], index: 2, kind: input, shape index: {}]
  %s3 = inlined_call_operand.hbm [shape: f32[40,144], index: 3, kind: output, shape index: {}]
  %s4 = sld [smem:[#allocation0]]
  $region45: #{tpu_custom_call.1} parent=0
    _
  %s6 = ssub.s32 1, %s4
  %s7 = scalar_select 0, %s6, %s4
  $region1: #{tpu_custom_call.1} parent=0
    #allocation2 [shape = 'u8[16384]{0}', space=vmem, size = 0x4000, scoped, tag = 'output window, operand 0']
    #allocation3 [shape = 's32[2]{0}', space=sflag, size = 0x8, scoped, tag = 'scoped memory for tpu_custom_call.1']
    %8 = vsyncpa [#allocation3], 0
    %s9 = scalar_lea.sflag [#allocation3], 1
    %10 = vsyncpa %s9, 0
    loop: start=0, step=1, limit=7
    $region2: #{tpu_custom_call.1} parent=1 // loop_pre_header
      _
    $region3: #{tpu_custom_call.1} parent=1 // loop_header
      %s12 = sphi 0, %s16
      %p13 = scmp.ge.s32.totalorder %s12, 7
      %s22 = sphi 0, %s24
      %s25 = sphi 0, %s22
      %s26 = sphi 0, %s25
      %s42 = sphi 0, %s26
      %s46 = sphi 0, %s46
      %s48 = sphi 0, %s46
      %s49 = sphi 0, %s48
      %s63 = sphi 0, %s49
      %s67 = sphi 0, %s67
      %s69 = sphi 0, %s67
      %s70 = sphi 0, %s69
      %s84 = sphi 0, %s70
      %s90 = sphi 0, %s92
      %s93 = sphi 0, %s90
      %s94 = sphi 0, %s93
      %s110 = sphi 0, %s94
    $region4: #{tpu_custom_call.1} parent=1 // loop_header_branch
      %15 = sbr.rel (%p13) target = $region8
    $region5: #{tpu_custom_call.1} parent=1 // loop_body
      %s17 = ssub.s32 %s12, 1
      %s18 = ssub.s32 %s12, 2
      %s19 = sadd.s32 %s12, 1
      %s20 = ssub.s32 %s12, %s19
      %p21 = scmp.eq.s32.totalorder %s20, 0
      %s23 = sadd.s32 %s22, 1
      %s24 = scalar_select %p21, %s22, %s23
      %p27 = pneg %p21
      %p28 = scmp.eq.s32.totalorder %s12, 4
      %p29 = por %p27, %p28
      %p30 = scmp.ne.s32.totalorder %s22, %s25
      %p31 = scmp.eq.s32.totalorder %s12, 0
      %p32 = por %p30, %p31
      %p33 = scmp.ne.s32.totalorder %s22, %s25
      %p34 = scmp.eq.s32.totalorder %s17, 4
      %p35 = por %p33, %p34
      %p36 = scmp.ne.s32.totalorder %s25, %s26
      %p37 = scmp.eq.s32.totalorder %s17, 0
      %p38 = por %p36, %p37
      %p39 = scmp.ne.s32.totalorder %s25, %s26
      %p40 = scmp.eq.s32.totalorder %s18, 4
      %p41 = por %p39, %p40
      %p43 = scmp.ne.s32.totalorder %s26, %s42
      %p44 = scmp.eq.s32.totalorder %s18, 0
      %p45 = por %p43, %p44
      %s47 = sadd.s32 %s46, 1
      %p50 = scmp.eq.s32.totalorder %s12, 4
      %p51 = scmp.ne.s32.totalorder %s46, %s48
      %p52 = scmp.eq.s32.totalorder %s12, 0
      %p53 = por %p51, %p52
      %p54 = scmp.ne.s32.totalorder %s46, %s48
      %p55 = scmp.eq.s32.totalorder %s17, 4
      %p56 = por %p54, %p55
      %p57 = scmp.ne.s32.totalorder %s48, %s49
      %p58 = scmp.eq.s32.totalorder %s17, 0
      %p59 = por %p57, %p58
      %p60 = scmp.ne.s32.totalorder %s48, %s49
      %p61 = scmp.eq.s32.totalorder %s18, 4
      %p62 = por %p60, %p61
      %p64 = scmp.ne.s32.totalorder %s49, %s63
      %p65 = scmp.eq.s32.totalorder %s18, 0
      %p66 = por %p64, %p65
      %s68 = sadd.s32 %s67, 1
      %p71 = scmp.eq.s32.totalorder %s12, 4
      %p72 = scmp.ne.s32.totalorder %s67, %s69
      %p73 = scmp.eq.s32.totalorder %s12, 0
      %p74 = por %p72, %p73
      %p75 = scmp.ne.s32.totalorder %s67, %s69
      %p76 = scmp.eq.s32.totalorder %s17, 4
      %p77 = por %p75, %p76
      %p78 = scmp.ne.s32.totalorder %s69, %s70
      %p79 = scmp.eq.s32.totalorder %s17, 0
      %p80 = por %p78, %p79
      %p81 = scmp.ne.s32.totalorder %s69, %s70
      %p82 = scmp.eq.s32.totalorder %s18, 4
      %p83 = por %p81, %p82
      %p85 = scmp.ne.s32.totalorder %s70, %s84
      %p86 = scmp.eq.s32.totalorder %s18, 0
      %p87 = por %p85, %p86
      %s88 = ssub.s32 %s12, %s19
      %p89 = scmp.eq.s32.totalorder %s88, 0
      %s91 = sadd.s32 %s90, 1
      %s92 = scalar_select %p89, %s90, %s91
      %p95 = pneg %p89
      %p96 = scmp.eq.s32.totalorder %s12, 4
      %p97 = por %p95, %p96
      %p98 = scmp.ne.s32.totalorder %s90, %s93
      %p99 = scmp.eq.s32.totalorder %s12, 0
      %p100 = por %p98, %p99
      %p101 = scmp.ne.s32.totalorder %s90, %s93
      %p102 = scmp.eq.s32.totalorder %s17, 4
      %p103 = por %p101, %p102
      %p104 = scmp.ne.s32.totalorder %s93, %s94
      %p105 = scmp.eq.s32.totalorder %s17, 0
      %p106 = por %p104, %p105
      %p107 = scmp.ne.s32.totalorder %s93, %s94
      %p108 = scmp.eq.s32.totalorder %s18, 4
      %p109 = por %p107, %p108
      %p111 = scmp.ne.s32.totalorder %s94, %s110
      %p112 = scmp.eq.s32.totalorder %s18, 0
      %p113 = por %p111, %p112
      %p114 = scmp.le.s32.totalorder 1, %s12
      %p115 = scmp.lt.s32.totalorder %s12, 6
      %p116 = pnand %p114, %p115
      %p117 = pneg %p116
      // Predicated region
      $region9: #{tpu_custom_call.1} parent=5 // pred_check
        _
      $region10: #{tpu_custom_call.1} parent=5 // pred_check_branch
        %119 = sbr.rel (%p116) target = $region12
      $region11: #{tpu_custom_call.1} parent=5 // pred_region
        %s120 = ssub.s32 %s12, 1
        // Predicated region
        $region13: #{tpu_custom_call.1} parent=11 // pred_check
          %p121 = pneg %p59
        $region14: #{tpu_custom_call.1} parent=11 // pred_check_branch
          %123 = sbr.rel (%p121) target = $region16
        $region15: #{tpu_custom_call.1} parent=11 // pred_region
          _
        $region16: #{tpu_custom_call.1} parent=11 // pred_fallthru
          _
        // Predicated region
        $region17: #{tpu_custom_call.1} parent=11 // pred_check
          %p124 = pneg %p80
        $region18: #{tpu_custom_call.1} parent=11 // pred_check_branch
          %126 = sbr.rel (%p124) target = $region20
        $region19: #{tpu_custom_call.1} parent=11 // pred_region
          _
        $region20: #{tpu_custom_call.1} parent=11 // pred_fallthru
          _
      $region12: #{tpu_custom_call.1} parent=5 // pred_fallthru
        _
      %p127 = scmp.lt.s32.totalorder %s12, 5
      // Predicated region
      $region21: #{tpu_custom_call.1} parent=5 // pred_check
        %p128 = pneg %p127
      $region22: #{tpu_custom_call.1} parent=5 // pred_check_branch
        %130 = sbr.rel (%p128) target = $region24
      $region23: #{tpu_custom_call.1} parent=5 // pred_region
        // Predicated region
        $region25: #{tpu_custom_call.1} parent=23 // pred_check
          %p131 = pneg %p32
        $region26: #{tpu_custom_call.1} parent=23 // pred_check_branch
          %133 = sbr.rel (%p131) target = $region28
        $region27: #{tpu_custom_call.1} parent=23 // pred_region
          %p134 = scmp.lt.s32.totalorder %s12, 4
          %s135 = scalar_select %p134, %s12, 4
          %s136 = smul.addr %s135, 4
          %s137 = smul.addr %s136, 4
          %s138 = scalar_lea.vmem %s0, %s137
        $region28: #{tpu_custom_call.1} parent=23 // pred_fallthru
          _
      $region24: #{tpu_custom_call.1} parent=5 // pred_fallthru
        _
      %p139 = scmp.le.s32.totalorder 1, %s12
      %p140 = scmp.lt.s32.totalorder %s12, 6
      %p141 = pnand %p139, %p140
      %p142 = pneg %p141
      // Predicated region
      $region29: #{tpu_custom_call.1} parent=5 // pred_check
        _
      $region30: #{tpu_custom_call.1} parent=5 // pred_check_branch
        %144 = sbr.rel (%p141) target = $region32
      $region31: #{tpu_custom_call.1} parent=5 // pred_region
        %s145 = ssub.s32 %s12, 1
        %p146 = scmp.lt.s32.totalorder %s17, 4
        %s147 = scalar_select %p146, %s17, 4
        %s148 = smul.addr %s147, 4
        %s149 = smul.addr %s148, 4
        %s150 = scalar_lea.vmem %s0, %s149
        %p151 = pneg %p38
        %p152 = pneg %p35
        %p153 = pneg %p59
        %p154 = pneg %p56
        %p155 = pneg %p80
        %p156 = pneg %p77
        %p157 = pneg %p106
        %p158 = pneg %p103
        %s159 = sand.u32 %s93, 1
        %s160 = scalar_lea.sflag [#allocation3], %s159
        %s161 = sand.u32 %s93, 1
        %s162 = smul.addr %s161, 16
        %s163 = scalar_lea.vmem [#allocation2], %s162
        %p164 = scmp.lt.s32.totalorder %s17, 4
        %s165 = scalar_select %p164, %s17, 4
        %s166 = smul.addr %s165, 4
        %s167 = smul.addr %s166, 4
        %s168 = scalar_lea.vmem %s0, %s167
        %v170 = vld [vmem:[%s168] sm:$0xff]
        %v171 = vld [vmem:[%s168 + $0x8] sm:$0xff]
        %v172 = vld [vmem:[%s1] sm:$0xff]
        %v173 = vld [vmem:[%s1 + $0x8] sm:$0xff]
        %v174 = vld [vmem:[%s1 + $0x10] sm:$0xff]
        %v175 = vld [vmem:[%s1 + $0x18] sm:$0xff]
        %v176 = vld [vmem:[%s1 + $0x20] sm:$0xff]
        %v177 = vld [vmem:[%s1 + $0x28] sm:$0xff]
        %v178 = vld [vmem:[%s1 + $0x30] sm:$0xff]
        %v179 = vld [vmem:[%s1 + $0x38] sm:$0xff]
        %v180 = vld [vmem:[%s1 + $0x40] sm:$0xff]
        %v181 = vld [vmem:[%s1 + $0x48] sm:$0xff]
        %v182 = vld [vmem:[%s1 + $0x50] sm:$0xff]
        %v183 = vld [vmem:[%s1 + $0x58] sm:$0xff]
        %v184 = vld [vmem:[%s1 + $0x60] sm:$0xff]
        %v185 = vld [vmem:[%s1 + $0x68] sm:$0xff]
        %v186 = vld [vmem:[%s1 + $0x70] sm:$0xff]
        %v187 = vld [vmem:[%s1 + $0x78] sm:$0xff]
        %v188 = vld [vmem:[%s1 + $0x80] sm:$0xff]
        %v189 = vld [vmem:[%s1 + $0x88] sm:$0xff]
        %v190 = vld [vmem:[%s1 + $0x90] sm:$0xff]
        %v191 = vld [vmem:[%s1 + $0x98] sm:$0xff]
        %v192 = vld [vmem:[%s1 + $0xa0] sm:$0xff]
        %v193 = vld [vmem:[%s1 + $0xa8] sm:$0xff]
        %v194 = vld [vmem:[%s1 + $0xb0] sm:$0xff]
        %v195 = vld [vmem:[%s1 + $0xb8] sm:$0xff]
        %v196 = vld [vmem:[%s1 + $0xc0] sm:$0xff]
        %v197 = vld [vmem:[%s1 + $0xc8] sm:$0xff]
        %v198 = vld [vmem:[%s1 + $0xd0] sm:$0xff]
        %v199 = vld [vmem:[%s1 + $0xd8] sm:$0xff]
        %v200 = vld [vmem:[%s1 + $0xe0] sm:$0xff]
        %v201 = vld [vmem:[%s1 + $0xe8] sm:$0xff]
        %v202 = vld [vmem:[%s1 + $0xf0] sm:$0xff]
        %v203 = vld [vmem:[%s1 + $0xf8] sm:$0xff]
        %v204 = vld [vmem:[%s1 + $0x100] sm:$0xff]
        %v205 = vld [vmem:[%s1 + $0x108] sm:$0xff]
        %v206 = vld [vmem:[%s1 + $0x110] sm:$0xff]
        %v207 = vld [vmem:[%s1 + $0x118] sm:$0xff]
        %v208 = vld [vmem:[%s1 + $0x120] sm:$0xff]
        %v209 = vld [vmem:[%s1 + $0x128] sm:$0xff]
        %v210 = vld [vmem:[%s1 + $0x130] sm:$0xff]
        %v211 = vld [vmem:[%s1 + $0x138] sm:$0xff]
        %v212 = vld [vmem:[%s1 + $0x140] sm:$0xff]
        %v213 = vld [vmem:[%s1 + $0x148] sm:$0xff]
        %v214 = vld [vmem:[%s1 + $0x150] sm:$0xff]
        %v215 = vld [vmem:[%s1 + $0x158] sm:$0xff]
        %v216 = vld [vmem:[%s1 + $0x160] sm:$0xff]
        %v217 = vld [vmem:[%s1 + $0x168] sm:$0xff]
        %v218 = vld [vmem:[%s1 + $0x170] sm:$0xff]
        %v219 = vld [vmem:[%s1 + $0x178] sm:$0xff]
        %v220 = vld [vmem:[%s1 + $0x180] sm:$0xff]
        %v221 = vld [vmem:[%s1 + $0x188] sm:$0xff]
        %v222 = vld [vmem:[%s1 + $0x190] sm:$0xff]
        %v223 = vld [vmem:[%s1 + $0x198] sm:$0xff]
        %v224 = vld [vmem:[%s1 + $0x1a0] sm:$0xff]
        %v225 = vld [vmem:[%s1 + $0x1a8] sm:$0xff]
        %v226 = vld [vmem:[%s1 + $0x1b0] sm:$0xff]
        %v227 = vld [vmem:[%s1 + $0x1b8] sm:$0xff]
        %v228 = vld [vmem:[%s1 + $0x1c0] sm:$0xff]
        %v229 = vld [vmem:[%s1 + $0x1c8] sm:$0xff]
        %v230 = vld [vmem:[%s1 + $0x1d0] sm:$0xff]
        %v231 = vld [vmem:[%s1 + $0x1d8] sm:$0xff]
        %v232 = vld [vmem:[%s2] sm:$0x3]
        %v234 = vlaneseq
        %v235 = vshrl.u32 %v234, 7
        %v236 = vsub.s32 0, %v235
        %v237 = vrot.slane %v232, %v236
        %v238 = vlaneseq
        %v239 = vshrl.u32 %v238, 7
        %v240 = vsub.s32 1, %v239
        %v241 = vrot.slane %v232, %v240
        %v246 = vunpack.c.l.b16 %v170
        %v247 = vunpack.c.h.b16 %v170
        %v248 = vunpack.c.l.b16 %v171
        %v249 = vunpack.c.h.b16 %v171
        %v250 = vpack.c.b16 %v246, %v246
        %v251 = vpack.c.b16 %v247, %v247
        %v252 = vpack.c.b16 %v248, %v248
        %v253 = vpack.c.b16 %v249, %v249
        %v317 = vunpack.c.l.b16 %v172
        %v318 = vunpack.c.h.b16 %v172
        %v319 = vunpack.c.l.b16 %v173
        %v320 = vunpack.c.h.b16 %v173
        %v321 = vunpack.c.l.b16 %v174
        %v322 = vunpack.c.h.b16 %v174
        %v323 = vunpack.c.l.b16 %v175
        %v324 = vunpack.c.h.b16 %v175
        %v325 = vunpack.c.l.b16 %v176
        %v326 = vunpack.c.h.b16 %v176
        %v327 = vunpack.c.l.b16 %v177
        %v328 = vunpack.c.h.b16 %v177
        %v329 = vunpack.c.l.b16 %v178
        %v330 = vunpack.c.h.b16 %v178
        %v331 = vunpack.c.l.b16 %v179
        %v332 = vunpack.c.h.b16 %v179
        %v333 = vunpack.c.l.b16 %v180
        %v334 = vunpack.c.h.b16 %v180
        %v335 = vunpack.c.l.b16 %v181
        %v336 = vunpack.c.h.b16 %v181
        %v337 = vunpack.c.l.b16 %v182
        %v338 = vunpack.c.h.b16 %v182
        %v339 = vunpack.c.l.b16 %v183
        %v340 = vunpack.c.h.b16 %v183
        %v341 = vunpack.c.l.b16 %v184
        %v342 = vunpack.c.h.b16 %v184
        %v343 = vunpack.c.l.b16 %v185
        %v344 = vunpack.c.h.b16 %v185
        %v345 = vunpack.c.l.b16 %v186
        %v346 = vunpack.c.h.b16 %v186
        %v347 = vunpack.c.l.b16 %v187
        %v348 = vunpack.c.h.b16 %v187
        %v349 = vunpack.c.l.b16 %v188
        %v350 = vunpack.c.h.b16 %v188
        %v351 = vunpack.c.l.b16 %v189
        %v352 = vunpack.c.h.b16 %v189
        %v353 = vunpack.c.l.b16 %v190
        %v354 = vunpack.c.h.b16 %v190
        %v355 = vunpack.c.l.b16 %v191
        %v356 = vunpack.c.h.b16 %v191
        %v357 = vunpack.c.l.b16 %v192
        %v358 = vunpack.c.h.b16 %v192
        %v359 = vunpack.c.l.b16 %v193
        %v360 = vunpack.c.h.b16 %v193
        %v361 = vunpack.c.l.b16 %v194
        %v362 = vunpack.c.h.b16 %v194
        %v363 = vunpack.c.l.b16 %v195
        %v364 = vunpack.c.h.b16 %v195
        %v365 = vunpack.c.l.b16 %v196
        %v366 = vunpack.c.h.b16 %v196
        %v367 = vunpack.c.l.b16 %v197
        %v368 = vunpack.c.h.b16 %v197
        %v369 = vunpack.c.l.b16 %v198
        %v370 = vunpack.c.h.b16 %v198
        %v371 = vunpack.c.l.b16 %v199
        %v372 = vunpack.c.h.b16 %v199
        %v373 = vunpack.c.l.b16 %v200
        %v374 = vunpack.c.h.b16 %v200
        %v375 = vunpack.c.l.b16 %v201
        %v376 = vunpack.c.h.b16 %v201
        %v377 = vunpack.c.l.b16 %v202
        %v378 = vunpack.c.h.b16 %v202
        %v379 = vunpack.c.l.b16 %v203
        %v380 = vunpack.c.h.b16 %v203
        %v381 = vunpack.c.l.b16 %v204
        %v382 = vunpack.c.h.b16 %v204
        %v383 = vunpack.c.l.b16 %v205
        %v384 = vunpack.c.h.b16 %v205
        %v385 = vunpack.c.l.b16 %v206
        %v386 = vunpack.c.h.b16 %v206
        %v387 = vunpack.c.l.b16 %v207
        %v388 = vunpack.c.h.b16 %v207
        %v389 = vunpack.c.l.b16 %v208
        %v390 = vunpack.c.h.b16 %v208
        %v391 = vunpack.c.l.b16 %v209
        %v392 = vunpack.c.h.b16 %v209
        %v393 = vunpack.c.l.b16 %v210
        %v394 = vunpack.c.h.b16 %v210
        %v395 = vunpack.c.l.b16 %v211
        %v396 = vunpack.c.h.b16 %v211
        %v397 = vunpack.c.l.b16 %v212
        %v398 = vunpack.c.h.b16 %v212
        %v399 = vunpack.c.l.b16 %v213
        %v400 = vunpack.c.h.b16 %v213
        %v401 = vunpack.c.l.b16 %v214
        %v402 = vunpack.c.h.b16 %v214
        %v403 = vunpack.c.l.b16 %v215
        %v404 = vunpack.c.h.b16 %v215
        %v405 = vunpack.c.l.b16 %v216
        %v406 = vunpack.c.h.b16 %v216
        %v407 = vunpack.c.l.b16 %v217
        %v408 = vunpack.c.h.b16 %v217
        %v409 = vunpack.c.l.b16 %v218
        %v410 = vunpack.c.h.b16 %v218
        %v411 = vunpack.c.l.b16 %v219
        %v412 = vunpack.c.h.b16 %v219
        %v413 = vunpack.c.l.b16 %v220
        %v414 = vunpack.c.h.b16 %v220
        %v415 = vunpack.c.l.b16 %v221
        %v416 = vunpack.c.h.b16 %v221
        %v417 = vunpack.c.l.b16 %v222
        %v418 = vunpack.c.h.b16 %v222
        %v419 = vunpack.c.l.b16 %v223
        %v420 = vunpack.c.h.b16 %v223
        %v421 = vunpack.c.l.b16 %v224
        %v422 = vunpack.c.h.b16 %v224
        %v423 = vunpack.c.l.b16 %v225
        %v424 = vunpack.c.h.b16 %v225
        %v425 = vunpack.c.l.b16 %v226
        %v426 = vunpack.c.h.b16 %v226
        %v427 = vunpack.c.l.b16 %v227
        %v428 = vunpack.c.h.b16 %v227
        %v429 = vunpack.c.l.b16 %v228
        %v430 = vunpack.c.h.b16 %v228
        %v431 = vunpack.c.l.b16 %v229
        %v432 = vunpack.c.h.b16 %v229
        %v433 = vunpack.c.l.b16 %v230
        %v434 = vunpack.c.h.b16 %v230
        %v435 = vunpack.c.l.b16 %v231
        %v436 = vunpack.c.h.b16 %v231
        %v437 = vpack.c.b16 %v319, %v317
        %v438 = vpack.c.b16 %v320, %v318
        %v439 = vpack.c.b16 %v323, %v321
        %v440 = vpack.c.b16 %v324, %v322
        %v441 = vpack.c.b16 %v327, %v325
        %v442 = vpack.c.b16 %v328, %v326
        %v443 = vpack.c.b16 %v331, %v329
        %v444 = vpack.c.b16 %v332, %v330
        %v445 = vpack.c.b16 %v335, %v333
        %v446 = vpack.c.b16 %v336, %v334
        %v447 = vpack.c.b16 %v339, %v337
        %v448 = vpack.c.b16 %v340, %v338
        %v449 = vpack.c.b16 %v343, %v341
        %v450 = vpack.c.b16 %v344, %v342
        %v451 = vpack.c.b16 %v347, %v345
        %v452 = vpack.c.b16 %v348, %v346
        %v453 = vpack.c.b16 %v351, %v349
        %v454 = vpack.c.b16 %v352, %v350
        %v455 = vpack.c.b16 %v355, %v353
        %v456 = vpack.c.b16 %v356, %v354
        %v457 = vpack.c.b16 %v359, %v357
        %v458 = vpack.c.b16 %v360, %v358
        %v459 = vpack.c.b16 %v363, %v361
        %v460 = vpack.c.b16 %v364, %v362
        %v461 = vpack.c.b16 %v367, %v365
        %v462 = vpack.c.b16 %v368, %v366
        %v463 = vpack.c.b16 %v371, %v369
        %v464 = vpack.c.b16 %v372, %v370
        %v465 = vpack.c.b16 %v375, %v373
        %v466 = vpack.c.b16 %v376, %v374
        %v467 = vpack.c.b16 %v379, %v377
        %v468 = vpack.c.b16 %v380, %v378
        %v469 = vpack.c.b16 %v383, %v381
        %v470 = vpack.c.b16 %v384, %v382
        %v471 = vpack.c.b16 %v387, %v385
        %v472 = vpack.c.b16 %v388, %v386
        %v473 = vpack.c.b16 %v391, %v389
        %v474 = vpack.c.b16 %v392, %v390
        %v475 = vpack.c.b16 %v395, %v393
        %v476 = vpack.c.b16 %v396, %v394
        %v477 = vpack.c.b16 %v399, %v397
        %v478 = vpack.c.b16 %v400, %v398
        %v479 = vpack.c.b16 %v403, %v401
        %v480 = vpack.c.b16 %v404, %v402
        %v481 = vpack.c.b16 %v407, %v405
        %v482 = vpack.c.b16 %v408, %v406
        %v483 = vpack.c.b16 %v411, %v409
        %v484 = vpack.c.b16 %v412, %v410
        %v485 = vpack.c.b16 %v415, %v413
        %v486 = vpack.c.b16 %v416, %v414
        %v487 = vpack.c.b16 %v419, %v417
        %v488 = vpack.c.b16 %v420, %v418
        %v489 = vpack.c.b16 %v423, %v421
        %v490 = vpack.c.b16 %v424, %v422
        %v491 = vpack.c.b16 %v427, %v425
        %v492 = vpack.c.b16 %v428, %v426
        %v493 = vpack.c.b16 %v431, %v429
        %v494 = vpack.c.b16 %v432, %v430
        %v495 = vpack.c.b16 %v435, %v433
        %v496 = vpack.c.b16 %v436, %v434
        %vm557 = vcmask 785408
        %v559 = vsel %vm557, %v253, 0
        %561 = vmatprep.subr.bf16.mxu0 %v438
        %562 = vmatpush1.bf16.msra.mxu0 %v437
        %563 = vmatprep.subr.bf16.mxu0 %v440
        %564 = vmatpush1.bf16.msra.mxu0 %v439
        %565 = vmatprep.subr.bf16.mxu0 %v442
        %566 = vmatpush1.bf16.msra.mxu0 %v441
        %567 = vmatprep.subr.bf16.mxu0 %v444
        %568 = vmatpush1.bf16.msra.mxu0 %v443
        %569 = vmatprep.subr.bf16.mxu0 %v446
        %570 = vmatpush1.bf16.msra.mxu0 %v445
        %571 = vmatprep.subr.bf16.mxu0 %v448
        %572 = vmatpush1.bf16.msra.mxu0 %v447
        %573 = vmatprep.subr.bf16.mxu0 %v450
        %574 = vmatpush1.bf16.msra.mxu0 %v449
        %575 = vmatprep.subr.bf16.mxu0 %v452
        %576 = vmatpush1.bf16.msra.mxu0 %v451
        %577 = vmatprep.subr.bf16.mxu0 %v454
        %578 = vmatpush1.bf16.msra.mxu0 %v453
        %579 = vmatprep.subr.bf16.mxu0 %v456
        %580 = vmatpush1.bf16.msra.mxu0 %v455
        %581 = vmatprep.subr.bf16.mxu0 %v458
        %582 = vmatpush1.bf16.msra.mxu0 %v457
        %583 = vmatprep.subr.bf16.mxu0 %v460
        %584 = vmatpush1.bf16.msra.mxu0 %v459
        %585 = vmatprep.subr.bf16.mxu0 %v462
        %586 = vmatpush1.bf16.msra.mxu0 %v461
        %587 = vmatprep.subr.bf16.mxu0 %v464
        %588 = vmatpush1.bf16.msra.mxu0 %v463
        %589 = vmatprep.subr.bf16.mxu0 %v466
        %590 = vmatpush1.bf16.msra.mxu0 %v465
        %591 = vmatprep.subr.bf16.mxu0 %v468
        %592 = vmatpush1.bf16.msra.mxu0 %v467
        %593 = vmatprep.mubr.bf16.mxu0 %v251
        %594 = vmatmul.mubr.bf16.gmra.mrb[0].mxu0 %v250
        %v595 = vpop.f32.mrb[0].mxu0
        %v596 = vadd.f32 %v237, %v595
        %v597 = vpop.f32.mrb[0].mxu0
        %v598 = vadd.f32 %v241, %v597
        %v599 = vpop.f32.mrb[0].mxu0
        %v600 = vpop.f32.mrb[0].mxu0
        %601 = vdwg.mxu0
        %602 = vmatprep.subr.bf16.mxu0 %v470
        %603 = vmatpush1.bf16.msra.mxu0 %v469
        %604 = vmatprep.subr.bf16.mxu0 %v472
        %605 = vmatpush1.bf16.msra.mxu0 %v471
        %606 = vmatprep.subr.bf16.mxu0 %v474
        %607 = vmatpush1.bf16.msra.mxu0 %v473
        %608 = vmatprep.subr.bf16.mxu0 %v476
        %609 = vmatpush1.bf16.msra.mxu0 %v475
        %610 = vmatprep.subr.bf16.mxu0 %v478
        %611 = vmatpush1.bf16.msra.mxu0 %v477
        %612 = vmatprep.subr.bf16.mxu0 %v480
        %613 = vmatpush1.bf16.msra.mxu0 %v479
        %614 = vmatprep.subr.bf16.mxu0 %v482
        %615 = vmatpush1.bf16.msra.mxu0 %v481
        %616 = vmatprep.subr.bf16.mxu0 %v484
        %617 = vmatpush1.bf16.msra.mxu0 %v483
        %618 = vmatprep.subr.bf16.mxu0 %v486
        %619 = vmatpush1.bf16.msra.mxu0 %v485
        %620 = vmatprep.subr.bf16.mxu0 %v488
        %621 = vmatpush1.bf16.msra.mxu0 %v487
        %622 = vmatprep.subr.bf16.mxu0 %v490
        %623 = vmatpush1.bf16.msra.mxu0 %v489
        %624 = vmatprep.subr.bf16.mxu0 %v492
        %625 = vmatpush1.bf16.msra.mxu0 %v491
        %626 = vmatprep.subr.bf16.mxu0 %v494
        %627 = vmatpush1.bf16.msra.mxu0 %v493
        %628 = vmatprep.subr.bf16.mxu0 %v496
        %629 = vmatpush1.bf16.msra.mxu0 %v495
        %630 = vmatprep.subr.bf16.mxu0 0
        %631 = vmatpush1.bf16.msra.mxu0 0
        %632 = vmatprep.subr.bf16.mxu0 0
        %633 = vmatpush1.bf16.msra.mxu0 0
        %634 = vmatprep.mubr.bf16.mxu0 %v559
        %635 = vmatmul.mubr.bf16.gmra.mrb[0].mxu0 %v252
        %v636 = vpop.f32.mrb[0].mxu0
        %v637 = vadd.f32 %v596, %v636
        %v638 = vpop.f32.mrb[0].mxu0
        %v639 = vadd.f32 %v598, %v638
        %v640 = vpop.f32.mrb[0].mxu0
        %v641 = vpop.f32.mrb[0].mxu0
        %642 = vdwg.mxu0
        %643 = vst [vmem:[%s163] sm:$0xff] %v637
        %vm644 = vcmask 130048
        %645 = vst.msk [vmem:[%s163 + $0x8] sm:$0xff] %vm644, %v639
        %s646 = sand.u32 %s93, 1
        %s647 = scalar_lea.sflag [#allocation3], %s646
        %s648 = sand.u32 %s93, 1
        %s649 = smul.addr %s648, 16
        %s650 = scalar_lea.vmem [#allocation2], %s649
        // Predicated region
        $region33: #{tpu_custom_call.1} parent=31 // pred_check
          %p651 = pneg %p103
        $region34: #{tpu_custom_call.1} parent=31 // pred_check_branch
          %653 = sbr.rel (%p651) target = $region36
        $region35: #{tpu_custom_call.1} parent=31 // pred_region
          %s655 = ssub.s32 256, 256
          %656 = vsyncadd %s647, %s655
          %s657 = smul.addr %s17, 2
          %s658 = smul.addr %s657, 128
          %s659 = scalar_lea.hbm %s3, %s658
          %s661 = sshll.u32 %s650, 4
          %s662 = int_to_ptr.vmem [resolvable:$true] %s661
          %664 = dma.vmem_to_hbm [thread:$0]  %s662, 256, %s659, %s647
        $region36: #{tpu_custom_call.1} parent=31 // pred_fallthru
          _
      $region32: #{tpu_custom_call.1} parent=5 // pred_fallthru
        _
      %p665 = scmp.le.s32.totalorder 2, %s12
      // Predicated region
      $region37: #{tpu_custom_call.1} parent=5 // pred_check
        %p666 = pneg %p665
      $region38: #{tpu_custom_call.1} parent=5 // pred_check_branch
        %668 = sbr.rel (%p666) target = $region40
      $region39: #{tpu_custom_call.1} parent=5 // pred_region
        %s669 = ssub.s32 %s12, 2
        // Predicated region
        $region41: #{tpu_custom_call.1} parent=39 // pred_check
          %p670 = pneg %p109
        $region42: #{tpu_custom_call.1} parent=39 // pred_check_branch
          %672 = sbr.rel (%p670) target = $region44
        $region43: #{tpu_custom_call.1} parent=39 // pred_region
          %s673 = sand.u32 %s94, 1
          %s674 = scalar_lea.sflag [#allocation3], %s673
          %s675 = sand.u32 %s94, 1
          %s676 = smul.addr %s675, 16
          %s677 = scalar_lea.vmem [#allocation2], %s676
          %678 = dma.done %s674, 256
        $region44: #{tpu_custom_call.1} parent=39 // pred_fallthru
          _
      $region40: #{tpu_custom_call.1} parent=5 // pred_fallthru
        _
    $region6: #{tpu_custom_call.1} parent=1 // loop_footer
      %s16 = sadd.s32 1, %s12
    $region7: #{tpu_custom_call.1} parent=1 // loop_footer_branch
      %11 = sbr.rel target = $region3
    $region8: #{tpu_custom_call.1} parent=1 // loop_exit
      _
    %679 = vsyncpa [#allocation3], 1
    %s680 = scalar_lea.sflag [#allocation3], 1
    %681 = vsyncpa %s680, 1

</llo_original>
